<compile_context>
chip_gen: v7x
topology: tpu7x:2x2x1
jax: 0.10.0
libtpu: 0.0.40
codegen_flags: <defaults>
</compile_context>

<pallas_src>
import functools

import jax
import jax.numpy as jnp
from jax.experimental import pallas as pl
from jax.experimental.pallas import tpu as pltpu

FEAT = 400          # video encoder output dim (Kinetics-400 logits)
HIDDEN = 100        # feat_dim
N_ACTION = 8        # len(EVENT_DICTIONARY_action_class)
N_OFFENCE = 4       # len(EVENT_DICTIONARY_offence_severity_class)
OUT_PAD = 16        # lane-packed output: action in 0:8, offence in 8:12, 12:16 zero
LN_EPS = 1e-5


# --------------------------------------------------------------------------- kernel
def mvfoul_heads_kernel(feats_ref, w1_ref, b1_ref, w2_ref, b2_ref, out_ref, *,
                        n_clips):
    # feats_ref: (TB, n_clips*FEAT) f32 -- one batch tile per grid step.
    # clip_aggregation == 'mean': accumulate the V lane-slices in f32, slice by slice
    # (no (TB, V, FEAT) f32 temporary).
    x = feats_ref[...]                                           # (TB, V*FEAT) f32
    agg = x[:, 0:FEAT]
    for v in range(1, n_clips):
        agg = agg + x[:, v * FEAT:(v + 1) * FEAT]
    agg = agg * (1.0 / n_clips)                                  # (TB, FEAT) f32

    # Shared LayerNorm statistics (identical for both heads; the per-head affine
    # gamma/beta is folded into w1/b1 host-side).  All stats math in f32.
    mu = jnp.mean(agg, axis=-1, keepdims=True)
    var = jnp.mean((agg - mu) ** 2, axis=-1, keepdims=True)
    xn = (agg - mu) * jax.lax.rsqrt(var + LN_EPS)                # (TB, FEAT) f32

    # Fused first Linear of both heads: (TB,400) @ (400,200) on the MXU (bf16 in,
    # f32 accumulate), then Sigmoid in f32 (EUP).
    h = jnp.dot(xn.astype(jnp.bfloat16), w1_ref[...],
                preferred_element_type=jnp.float32) + b1_ref[...]
    h = jax.nn.sigmoid(h)                                        # (TB, 200) f32

    # Block-diagonal second Linear: both heads finish in one MXU call, giving one
    # lane-packed (TB, 16) store instead of two masked (TB,8)/(TB,4) stores.
    out = jnp.dot(h.astype(jnp.bfloat16), w2_ref[...],
                  preferred_element_type=jnp.float32) + b2_ref[...]
    out_ref[...] = out


# ------------------------------------------------------------------ parameter setup
def init_params(key):
    ks = jax.random.split(key, 8)

    def lin(k, fan_in, fan_out):
        bound = 1.0 / (fan_in ** 0.5)
        kw, kb = jax.random.split(k)
        w = jax.random.uniform(kw, (fan_in, fan_out), jnp.float32, -bound, bound)
        b = jax.random.uniform(kb, (1, fan_out), jnp.float32, -bound, bound)
        return w, b

    params = {}
    # action head (non-trivial LayerNorm affine so the host-side fold is exercised)
    params["ga"] = 1.0 + 0.1 * jax.random.normal(ks[4], (1, FEAT), jnp.float32)
    params["bta"] = 0.1 * jax.random.normal(ks[5], (1, FEAT), jnp.float32)
    params["w1a"], params["b1a"] = lin(ks[0], FEAT, HIDDEN)
    params["w2a"], params["b2a"] = lin(ks[1], HIDDEN, N_ACTION)
    # offence-severity head
    params["go"] = 1.0 + 0.1 * jax.random.normal(ks[6], (1, FEAT), jnp.float32)
    params["bto"] = 0.1 * jax.random.normal(ks[7], (1, FEAT), jnp.float32)
    params["w1o"], params["b1o"] = lin(ks[2], FEAT, HIDDEN)
    params["w2o"], params["b2o"] = lin(ks[3], HIDDEN, N_OFFENCE)
    return params


def pack_params(params):
    """Fold the LayerNorm affine into the first Linear and pack both heads.

    (LN_core(x)*gamma + beta) @ W1 + b1  ==  LN_core(x) @ (gamma[:,None]*W1) + (beta@W1 + b1)
    (pure constant folding on weights, done once host-side).
    """
    def fold(gamma, beta, w1, b1):
        w = gamma.reshape(-1, 1) * w1                 # (FEAT, HIDDEN)
        b = beta @ w1 + b1                            # (1, HIDDEN)
        return w, b

    w1a, b1a = fold(params["ga"], params["bta"], params["w1a"], params["b1a"])
    w1o, b1o = fold(params["go"], params["bto"], params["w1o"], params["b1o"])

    # Fused first stage: (400, 200) bf16 weight, (1, 200) f32 bias.
    w1p = jnp.concatenate([w1a, w1o], axis=1).astype(jnp.bfloat16)
    b1p = jnp.concatenate([b1a, b1o], axis=1)

    # Block-diagonal second stage, lane-packed output (action 0:8, offence 8:12).
    w2p = jnp.zeros((2 * HIDDEN, OUT_PAD), jnp.float32)
    w2p = w2p.at[:HIDDEN, :N_ACTION].set(params["w2a"])
    w2p = w2p.at[HIDDEN:, N_ACTION:N_ACTION + N_OFFENCE].set(params["w2o"])
    w2p = w2p.astype(jnp.bfloat16)

    b2p = jnp.zeros((1, OUT_PAD), jnp.float32)
    b2p = b2p.at[:, :N_ACTION].set(params["b2a"])
    b2p = b2p.at[:, N_ACTION:N_ACTION + N_OFFENCE].set(params["b2o"])
    return w1p, b1p, w2p, b2p


# ---------------------------------------------------------------------- host wrapper
def _choose_tb(B):
    # Single large tile for small/medium B: one TC on v5e/v6e, and splitting a tiny
    # batch across v7x's two cores costs more (per-step overhead + MXU M-underfill)
    # than it gains.  Only split into >=2 tiles of ~256-512 rows for large B so each
    # v7x core still gets an MXU-filling tile.  Round to a multiple of 16 (bf16
    # sublane pack for the matmul inputs).
    if B < 512:
        tb = B
    else:
        n_steps = max(2, pl.cdiv(B, 512))
        tb = pl.cdiv(B, n_steps)
    return max(16, ((tb + 15) // 16) * 16)


def mvfoul_forward(feats, packed_params, *, tb=None):
    """feats: (B, V, FEAT) f32 -> (pred_action (B, 8), pred_offence_severity (B, 4))."""
    B, V, F = feats.shape
    assert F == FEAT
    w1p, b1p, w2p, b2p = packed_params

    # Free contiguous reshape: minor block dims become (TB, V*FEAT) so Mosaic lane/
    # sublane padding is ~4% instead of ~5x, and no host-side astype/pad HBM passes.
    feats2d = feats.reshape(B, V * FEAT)

    tb = _choose_tb(B) if tb is None else tb
    n_blocks = pl.cdiv(B, tb)

    feats_spec = pl.BlockSpec((tb, V * FEAT), lambda b: (b, 0))
    # Constant block index -> each packed parameter is DMA'd once per core (the
    # pipeline only re-issues a copy when the block index changes).
    const_spec = lambda p: pl.BlockSpec(p.shape, lambda b: (0, 0))
    out_spec = pl.BlockSpec((tb, OUT_PAD), lambda b: (b, 0))

    out = pl.pallas_call(
        functools.partial(mvfoul_heads_kernel, n_clips=V),
        out_shape=jax.ShapeDtypeStruct((B, OUT_PAD), jnp.float32),
        grid_spec=pltpu.PrefetchScalarGridSpec(
            num_scalar_prefetch=0,
            grid=(n_blocks,),
            in_specs=[feats_spec, const_spec(w1p), const_spec(b1p),
                      const_spec(w2p), const_spec(b2p)],
            out_specs=out_spec,
        ),
        compiler_params=pltpu.CompilerParams(
            dimension_semantics=("parallel",)),
    )(feats2d, w1p, b1p, w2p, b2p)

    return out[:, :N_ACTION], out[:, N_ACTION:N_ACTION + N_OFFENCE]


# ------------------------------------------------------------------------ references
def reference_forward(feats, params):
    """Full-f32 module-semantics reference: mean -> LN(400) -> Linear -> Sigmoid -> Linear."""
    agg = jnp.mean(feats, axis=1)

    def head(gamma, beta, w1, b1, w2, b2):
        mu = jnp.mean(agg, axis=-1, keepdims=True)
        var = jnp.mean((agg - mu) ** 2, axis=-1, keepdims=True)
        xn = (agg - mu) / jnp.sqrt(var + LN_EPS) * gamma + beta
        h = jax.nn.sigmoid(xn @ w1 + b1)
        return h @ w2 + b2

    a = head(params["ga"], params["bta"], params["w1a"], params["b1a"],
             params["w2a"], params["b2a"])
    o = head(params["go"], params["bto"], params["w1o"], params["b1o"],
             params["w2o"], params["b2o"])
    return a, o


def reference_forward_packed(feats, packed_params):
    """Pure-JAX reference following the kernel's exact numeric path
    (f32 mean/LN, bf16 only at the MXU inputs)."""
    w1p, b1p, w2p, b2p = packed_params
    agg = jnp.mean(feats, axis=1)
    mu = jnp.mean(agg, axis=-1, keepdims=True)
    var = jnp.mean((agg - mu) ** 2, axis=-1, keepdims=True)
    xn = (agg - mu) * jax.lax.rsqrt(var + LN_EPS)
    h = jax.nn.sigmoid(jnp.dot(xn.astype(jnp.bfloat16), w1p,
                               preferred_element_type=jnp.float32) + b1p)
    out = jnp.dot(h.astype(jnp.bfloat16), w2p,
                  preferred_element_type=jnp.float32) + b2p
    return out[:, :N_ACTION], out[:, N_ACTION:N_ACTION + N_OFFENCE]


# ------------------------------------------------------------------------------ main
if __name__ == "__main__":
    key = jax.random.PRNGKey(0)
    kf, kp = jax.random.split(key)

    B, V = 16, 4  # 16 samples, 4 clips each -> single 16-row grid step
    # stand-in for video_encoder(clips) outputs: (B, V, 400)
    feats = jax.random.normal(kf, (B, V, FEAT), jnp.float32)
    params = init_params(kp)
    packed = pack_params(params)

    pred_action, pred_offence = mvfoul_forward(feats, packed)
    pred_action = jax.block_until_ready(pred_action)
    pred_offence = jax.block_until_ready(pred_offence)
    assert pred_action.shape == (B, N_ACTION)
    assert pred_offence.shape == (B, N_OFFENCE)

    # Tight check against a pure-JAX reference following the same numeric path.
    qa, qo = reference_forward_packed(feats, packed)
    assert jnp.allclose(pred_action, qa, atol=2e-3, rtol=2e-3)
    assert jnp.allclose(pred_offence, qo, atol=2e-3, rtol=2e-3)

    # Module-semantics check against the full-f32 reference (differences come only
    # from bf16 quantization of the packed matmul weights / MXU inputs).
    ra, ro = reference_forward(feats, params)
    assert jnp.allclose(pred_action, ra, atol=2e-2, rtol=2e-2)
    assert jnp.allclose(pred_offence, ro, atol=2e-2, rtol=2e-2)

    print("KERNEL_OK")
</pallas_src>

<mosaic_0001>
module attributes {stable_mosaic.version = 11 : i64} {
  func.func @mvfoul_heads_kernel(%arg0: i32, %arg1: memref<16x1600xf32, #tpu.memory_space<vmem>>, %arg2: memref<400x200xbf16, #tpu.memory_space<vmem>>, %arg3: memref<1x200xf32, #tpu.memory_space<vmem>>, %arg4: memref<200x16xbf16, #tpu.memory_space<vmem>>, %arg5: memref<1x16xf32, #tpu.memory_space<vmem>>, %arg6: memref<16x16xf32, #tpu.memory_space<vmem>>) attributes {dimension_semantics = [#tpu.dimension_semantics<parallel>], iteration_bounds = array<i64: 1>, scalar_prefetch = 0 : i64, scratch_operands = 0 : i64, tpu.core_type = #tpu.core_type<tc>, window_params = [{transform_indices = @transform_0, window_bounds = array<i64: 16, 1600>}, {pipeline_mode = #tpu.pipeline_mode<synchronous>, transform_indices = @transform_1, window_bounds = array<i64: 400, 200>}, {pipeline_mode = #tpu.pipeline_mode<synchronous>, transform_indices = @transform_2, window_bounds = array<i64: 1, 200>}, {pipeline_mode = #tpu.pipeline_mode<synchronous>, transform_indices = @transform_3, window_bounds = array<i64: 200, 16>}, {pipeline_mode = #tpu.pipeline_mode<synchronous>, transform_indices = @transform_4, window_bounds = array<i64: 1, 16>}, {transform_indices = @transform_5, window_bounds = array<i64: 16, 16>}]} {
    %c0 = arith.constant 0 : index
    %c0_0 = arith.constant 0 : index
    %0 = vector.load %arg1[%c0, %c0_0] : memref<16x1600xf32, #tpu.memory_space<vmem>>, vector<16x1600xf32>
    %1 = vector.extract_strided_slice %0 {offsets = [0, 0], sizes = [16, 400], strides = [1, 1]} : vector<16x1600xf32> to vector<16x400xf32>
    %2 = vector.extract_strided_slice %0 {offsets = [0, 400], sizes = [16, 400], strides = [1, 1]} : vector<16x1600xf32> to vector<16x400xf32>
    %3 = arith.addf %1, %2 : vector<16x400xf32>
    %4 = vector.extract_strided_slice %0 {offsets = [0, 800], sizes = [16, 400], strides = [1, 1]} : vector<16x1600xf32> to vector<16x400xf32>
    %5 = arith.addf %3, %4 : vector<16x400xf32>
    %6 = vector.extract_strided_slice %0 {offsets = [0, 1200], sizes = [16, 400], strides = [1, 1]} : vector<16x1600xf32> to vector<16x400xf32>
    %7 = arith.addf %5, %6 : vector<16x400xf32>
    %cst = arith.constant 2.500000e-01 : f32
    %8 = vector.broadcast %cst : f32 to vector<16x400xf32>
    %9 = arith.mulf %7, %8 : vector<16x400xf32>
    %cst_1 = arith.constant dense<0.000000e+00> : vector<16xf32>
    %10 = vector.multi_reduction <add>, %9, %cst_1 [1] : vector<16x400xf32> to vector<16xf32>
    %11 = vector.shape_cast %10 : vector<16xf32> to vector<16x1xf32>
    %cst_2 = arith.constant 4.000000e+02 : f32
    %12 = vector.broadcast %cst_2 : f32 to vector<16x1xf32>
    %13 = arith.divf %11, %12 : vector<16x1xf32>
    %14 = vector.broadcast %13 : vector<16x1xf32> to vector<16x400xf32>
    %15 = arith.subf %9, %14 : vector<16x400xf32>
    %16 = arith.mulf %15, %15 : vector<16x400xf32>
    %cst_3 = arith.constant dense<0.000000e+00> : vector<16xf32>
    %17 = vector.multi_reduction <add>, %16, %cst_3 [1] : vector<16x400xf32> to vector<16xf32>
    %18 = vector.shape_cast %17 : vector<16xf32> to vector<16x1xf32>
    %cst_4 = arith.constant 4.000000e+02 : f32
    %19 = vector.broadcast %cst_4 : f32 to vector<16x1xf32>
    %20 = arith.divf %18, %19 : vector<16x1xf32>
    %21 = vector.broadcast %13 : vector<16x1xf32> to vector<16x400xf32>
    %22 = arith.subf %9, %21 : vector<16x400xf32>
    %cst_5 = arith.constant 9.99999974E-6 : f32
    %23 = vector.broadcast %cst_5 : f32 to vector<16x1xf32>
    %24 = arith.addf %20, %23 : vector<16x1xf32>
    %25 = math.rsqrt %24 : vector<16x1xf32>
    %26 = vector.broadcast %25 : vector<16x1xf32> to vector<16x400xf32>
    %27 = arith.mulf %22, %26 : vector<16x400xf32>
    %28 = arith.truncf %27 : vector<16x400xf32> to vector<16x400xbf16>
    %c0_6 = arith.constant 0 : index
    %c0_7 = arith.constant 0 : index
    %29 = vector.load %arg2[%c0_6, %c0_7] : memref<400x200xbf16, #tpu.memory_space<vmem>>, vector<400x200xbf16>
    %cst_8 = arith.constant dense<0.000000e+00> : vector<16x200xf32>
    %30 = tpu.matmul %28, %29, %cst_8 {dimension_numbers = #tpu.dot_dimension_numbers<[1], [0], [0], [1], [0, 0, 1, 1], [], []>} : vector<16x400xbf16>, vector<400x200xbf16>, vector<16x200xf32> -> vector<16x200xf32>
    %c0_9 = arith.constant 0 : index
    %c0_10 = arith.constant 0 : index
    %31 = vector.load %arg3[%c0_9, %c0_10] : memref<1x200xf32, #tpu.memory_space<vmem>>, vector<1x200xf32>
    %32 = vector.broadcast %31 : vector<1x200xf32> to vector<16x200xf32>
    %33 = arith.addf %30, %32 : vector<16x200xf32>
    %34 = arith.negf %33 : vector<16x200xf32>
    %35 = math.exp %34 : vector<16x200xf32>
    %cst_11 = arith.constant 1.000000e+00 : f32
    %36 = vector.broadcast %cst_11 : f32 to vector<16x200xf32>
    %37 = arith.addf %36, %35 : vector<16x200xf32>
    %38 = arith.divf %36, %37 : vector<16x200xf32>
    %39 = arith.truncf %38 : vector<16x200xf32> to vector<16x200xbf16>
    %c0_12 = arith.constant 0 : index
    %c0_13 = arith.constant 0 : index
    %40 = vector.load %arg4[%c0_12, %c0_13] : memref<200x16xbf16, #tpu.memory_space<vmem>>, vector<200x16xbf16>
    %cst_14 = arith.constant dense<0.000000e+00> : vector<16x16xf32>
    %41 = tpu.matmul %39, %40, %cst_14 {dimension_numbers = #tpu.dot_dimension_numbers<[1], [0], [0], [1], [0, 0, 1, 1], [], []>} : vector<16x200xbf16>, vector<200x16xbf16>, vector<16x16xf32> -> vector<16x16xf32>
    %c0_15 = arith.constant 0 : index
    %c0_16 = arith.constant 0 : index
    %42 = vector.load %arg5[%c0_15, %c0_16] : memref<1x16xf32, #tpu.memory_space<vmem>>, vector<1x16xf32>
    %43 = vector.broadcast %42 : vector<1x16xf32> to vector<16x16xf32>
    %44 = arith.addf %41, %43 : vector<16x16xf32>
    %c0_17 = arith.constant 0 : index
    %c0_18 = arith.constant 0 : index
    %45 = vector.load %arg6[%c0_17, %c0_18] : memref<16x16xf32, #tpu.memory_space<vmem>>, vector<16x16xf32>
    tpu.vector_store %arg6[%c0_17, %c0_18], %44 {strides = array<i32>} : memref<16x16xf32, #tpu.memory_space<vmem>>, vector<16x16xf32>,
    return
  }
  func.func @transform_0(%arg0: i32) -> (i32, i32) {
    %c0_i32 = arith.constant 0 : i32
    %c0_i32_0 = arith.constant 0 : i32
    return %arg0, %c0_i32 : i32, i32
  }
  func.func @transform_1(%arg0: i32) -> (i32, i32) {
    %c0_i32 = arith.constant 0 : i32
    %c0_i32_0 = arith.constant 0 : i32
    %c0_i32_1 = arith.constant 0 : i32
    return %c0_i32, %c0_i32_0 : i32, i32
  }
  func.func @transform_2(%arg0: i32) -> (i32, i32) {
    %c0_i32 = arith.constant 0 : i32
    %c0_i32_0 = arith.constant 0 : i32
    %c0_i32_1 = arith.constant 0 : i32
    return %c0_i32, %c0_i32_0 : i32, i32
  }
  func.func @transform_3(%arg0: i32) -> (i32, i32) {
    %c0_i32 = arith.constant 0 : i32
    %c0_i32_0 = arith.constant 0 : i32
    %c0_i32_1 = arith.constant 0 : i32
    return %c0_i32, %c0_i32_0 : i32, i32
  }
  func.func @transform_4(%arg0: i32) -> (i32, i32) {
    %c0_i32 = arith.constant 0 : i32
    %c0_i32_0 = arith.constant 0 : i32
    %c0_i32_1 = arith.constant 0 : i32
    return %c0_i32, %c0_i32_0 : i32, i32
  }
  func.func @transform_5(%arg0: i32) -> (i32, i32) {
    %c0_i32 = arith.constant 0 : i32
    %c0_i32_0 = arith.constant 0 : i32
    return %arg0, %c0_i32 : i32, i32
  }
}

</mosaic_0001>

<llo_original>
// kernel: tpu_custom_call.1
$region0: #{tpu_custom_call.1}
  #allocation0 [shape = 'u32[]', space=smem, size = 0x4, offset = 0x4, fixed_abs, tag = 'smem constant byte address 0x4 - core index']
  #allocation1 [shape = 'u32[144,128]{1,0:T(1,128)}', space=vmem, size = 0x12000, scoped, tag = 'internal scratch']
  %s0 = inlined_call_operand.hbm [shape: f32[16,1600], index: 0, kind: input, shape index: {}]
  %s1 = inlined_call_operand.hbm [shape: bf16[400,200], index: 1, kind: input, shape index: {}]
  %s2 = inlined_call_operand.vmem [shape: f32[1,200], index: 2, kind: input, shape index: {}]
  %s3 = inlined_call_operand.vmem [shape: bf16[200,16], index: 3, kind: input, shape index: {}]
  %s4 = inlined_call_operand.vmem [shape: f32[1,16], index: 4, kind: input, shape index: {}]
  %s5 = inlined_call_operand.hbm [shape: f32[16,16], index: 5, kind: output, shape index: {}]
  %s6 = sld [smem:[#allocation0]]
  $region38: #{tpu_custom_call.1} parent=0
    _
  %s8 = ssub.s32 1, %s6
  %s9 = scalar_select 0, %s8, %s6
  $region1: #{tpu_custom_call.1} parent=0
    #allocation2 [shape = 'u8[106496]{0}', space=vmem, size = 0x1a000, scoped, tag = 'input window, operand 0, single buffered']
    #allocation3 [shape = 's32[1]{0}', space=sflag, size = 0x4, scoped, tag = 'scoped memory for tpu_custom_call.1']
    #allocation4 [shape = 's32[1]{0}', space=sflag, size = 0x4, scoped, tag = 'scoped memory for tpu_custom_call.1']
    #allocation5 [shape = 'u8[204800]{0}', space=vmem, size = 0x32000, scoped, tag = 'input window, operand 1, single buffered']
    #allocation6 [shape = 's32[1]{0}', space=sflag, size = 0x4, scoped, tag = 'scoped memory for tpu_custom_call.1']
    #allocation7 [shape = 'u8[8192]{0}', space=vmem, size = 0x2000, scoped, tag = 'output window, operand 0, single buffered']
    %10 = vsyncpa [#allocation3], 0
    %11 = vsyncpa [#allocation6], 0
    %12 = vsyncpa [#allocation4], 0
    // Predicated region
    $region2: #{tpu_custom_call.1} parent=1 // pred_check
      _
    $region3: #{tpu_custom_call.1} parent=1 // pred_check_branch
      %14 = sbr.rel (0) target = $region5
    $region4: #{tpu_custom_call.1} parent=1 // pred_region
      %s16 = ssub.s32 3328, 3328
      %17 = vsyncadd [#allocation3], %s16
      %s18 = sshll.u32 [#allocation2], 4
      %s19 = int_to_ptr.vmem [resolvable:$true] %s18
      %24 = dma.hbm_to_vmem [thread:$0]  %s0, 3328, %s19, [#allocation3], 1664, 1664, 104
    $region5: #{tpu_custom_call.1} parent=1 // pred_fallthru
      _
    // Predicated region
    $region6: #{tpu_custom_call.1} parent=1 // pred_check
      _
    $region7: #{tpu_custom_call.1} parent=1 // pred_check_branch
      %26 = sbr.rel (0) target = $region9
    $region8: #{tpu_custom_call.1} parent=1 // pred_region
      %s28 = ssub.s32 6400, 6400
      %29 = vsyncadd [#allocation6], %s28
      %s30 = sshll.u32 [#allocation5], 4
      %s31 = int_to_ptr.vmem [resolvable:$true] %s30
      %36 = dma.hbm_to_vmem [thread:$0]  %s1, 6400, %s31, [#allocation6], 128, 128, 8
    $region9: #{tpu_custom_call.1} parent=1 // pred_fallthru
      _
    // Predicated region
    $region10: #{tpu_custom_call.1} parent=1 // pred_check
      _
    $region11: #{tpu_custom_call.1} parent=1 // pred_check_branch
      %38 = sbr.rel (0) target = $region13
    $region12: #{tpu_custom_call.1} parent=1 // pred_region
      _
    $region13: #{tpu_custom_call.1} parent=1 // pred_fallthru
      _
    // Predicated region
    $region14: #{tpu_custom_call.1} parent=1 // pred_check
      _
    $region15: #{tpu_custom_call.1} parent=1 // pred_check_branch
      %40 = sbr.rel (0) target = $region17
    $region16: #{tpu_custom_call.1} parent=1 // pred_region
      _
    $region17: #{tpu_custom_call.1} parent=1 // pred_fallthru
      _
    // Predicated region
    $region18: #{tpu_custom_call.1} parent=1 // pred_check
      _
    $region19: #{tpu_custom_call.1} parent=1 // pred_check_branch
      %42 = sbr.rel (0) target = $region21
    $region20: #{tpu_custom_call.1} parent=1 // pred_region
      _
    $region21: #{tpu_custom_call.1} parent=1 // pred_fallthru
      _
    // Predicated region
    $region22: #{tpu_custom_call.1} parent=1 // pred_check
      _
    $region23: #{tpu_custom_call.1} parent=1 // pred_check_branch
      %44 = sbr.rel (0) target = $region25
    $region24: #{tpu_custom_call.1} parent=1 // pred_region
      %45 = dma.done [#allocation3], 3328
    $region25: #{tpu_custom_call.1} parent=1 // pred_fallthru
      _
    // Predicated region
    $region26: #{tpu_custom_call.1} parent=1 // pred_check
      _
    $region27: #{tpu_custom_call.1} parent=1 // pred_check_branch
      %47 = sbr.rel (0) target = $region29
    $region28: #{tpu_custom_call.1} parent=1 // pred_region
      %48 = dma.done [#allocation6], 6400
    $region29: #{tpu_custom_call.1} parent=1 // pred_fallthru
      _
    %v50 = vld [vmem:[#allocation2] sm:$0xff]
    %v51 = vld [vmem:[#allocation2 + $0x8] sm:$0xff]
    %v52 = vld [vmem:[#allocation2 + $0x10] sm:$0xff]
    %v53 = vld [vmem:[#allocation2 + $0x18] sm:$0xff]
    %v54 = vld [vmem:[#allocation2 + $0x20] sm:$0xff]
    %v55 = vld [vmem:[#allocation2 + $0x28] sm:$0xff]
    %v56 = vld [vmem:[#allocation2 + $0x30] sm:$0xff]
    %v57 = vld [vmem:[#allocation2 + $0x38] sm:$0xff]
    %v58 = vld [vmem:[#allocation2 + $0x40] sm:$0xff]
    %v59 = vld [vmem:[#allocation2 + $0x48] sm:$0xff]
    %v60 = vld [vmem:[#allocation2 + $0x50] sm:$0xff]
    %v61 = vld [vmem:[#allocation2 + $0x58] sm:$0xff]
    %v62 = vld [vmem:[#allocation2 + $0x60] sm:$0xff]
    %v63 = vld [vmem:[#allocation2 + $0x68] sm:$0xff]
    %v64 = vld [vmem:[#allocation2 + $0x70] sm:$0xff]
    %v65 = vld [vmem:[#allocation2 + $0x78] sm:$0xff]
    %v66 = vld [vmem:[#allocation2 + $0x80] sm:$0xff]
    %v67 = vld [vmem:[#allocation2 + $0x88] sm:$0xff]
    %v68 = vld [vmem:[#allocation2 + $0x90] sm:$0xff]
    %v69 = vld [vmem:[#allocation2 + $0x98] sm:$0xff]
    %v70 = vld [vmem:[#allocation2 + $0xa0] sm:$0xff]
    %v71 = vld [vmem:[#allocation2 + $0xa8] sm:$0xff]
    %v72 = vld [vmem:[#allocation2 + $0xb0] sm:$0xff]
    %v73 = vld [vmem:[#allocation2 + $0xb8] sm:$0xff]
    %v74 = vld [vmem:[#allocation2 + $0xc0] sm:$0xff]
    %v75 = vld [vmem:[#allocation2 + $0xc8] sm:$0xff]
    %84 = vrot.lane.b32.xlu0 %v53, 112
    %v85 = vpop.permute.xlu0 %84
    %86 = vrot.lane.b32.xlu0 %v54, 112
    %v87 = vpop.permute.xlu0 %86
    %88 = vrot.lane.b32.xlu0 %v55, 112
    %v89 = vpop.permute.xlu0 %88
    %90 = vrot.lane.b32.xlu0 %v56, 112
    %v91 = vpop.permute.xlu0 %90
    %92 = vrot.lane.b32.xlu0 %v66, 112
    %v93 = vpop.permute.xlu0 %92
    %94 = vrot.lane.b32.xlu0 %v67, 112
    %v95 = vpop.permute.xlu0 %94
    %96 = vrot.lane.b32.xlu0 %v68, 112
    %v97 = vpop.permute.xlu0 %96
    %98 = vrot.lane.b32.xlu0 %v69, 112
    %v99 = vpop.permute.xlu0 %98
    %vm100 = vcmask 916480
    %v101 = vsel %vm100, %v85, %v87
    %v102 = vsel %vm100, %v87, %v89
    %v103 = vsel %vm100, %v89, %v91
    %v104 = vsel %vm100, %v93, %v95
    %v105 = vsel %vm100, %v95, %v97
    %v106 = vsel %vm100, %v97, %v99
    %v115 = vadd.f32 %v50, %v101
    %v116 = vadd.f32 %v51, %v102
    %v117 = vadd.f32 %v52, %v103
    %v118 = vadd.f32 %v53, %v91
    %v119 = vadd.f32 %v63, %v104
    %v120 = vadd.f32 %v64, %v105
    %v121 = vadd.f32 %v65, %v106
    %v122 = vadd.f32 %v66, %v99
    %129 = vrot.lane.b32.xlu0 %v56, 96
    %v130 = vpop.permute.xlu0 %129
    %131 = vrot.lane.b32.xlu0 %v57, 96
    %v132 = vpop.permute.xlu0 %131
    %133 = vrot.lane.b32.xlu0 %v58, 96
    %v134 = vpop.permute.xlu0 %133
    %135 = vrot.lane.b32.xlu0 %v59, 96
    %v136 = vpop.permute.xlu0 %135
    %137 = vrot.lane.b32.xlu0 %v69, 96
    %v138 = vpop.permute.xlu0 %137
    %139 = vrot.lane.b32.xlu0 %v70, 96
    %v140 = vpop.permute.xlu0 %139
    %141 = vrot.lane.b32.xlu0 %v71, 96
    %v142 = vpop.permute.xlu0 %141
    %143 = vrot.lane.b32.xlu0 %v72, 96
    %v144 = vpop.permute.xlu0 %143
    %vm145 = vcmask 785408
    %v146 = vsel %vm145, %v130, %v132
    %v147 = vsel %vm145, %v132, %v134
    %v148 = vsel %vm145, %v134, %v136
    %v149 = vsel %vm145, %v138, %v140
    %v150 = vsel %vm145, %v140, %v142
    %v151 = vsel %vm145, %v142, %v144
    %v160 = vadd.f32 %v115, %v146
    %v161 = vadd.f32 %v116, %v147
    %v162 = vadd.f32 %v117, %v148
    %v163 = vadd.f32 %v118, %v136
    %v164 = vadd.f32 %v119, %v149
    %v165 = vadd.f32 %v120, %v150
    %v166 = vadd.f32 %v121, %v151
    %v167 = vadd.f32 %v122, %v144
    %174 = vrot.lane.b32.xlu0 %v59, 80
    %v175 = vpop.permute.xlu0 %174
    %176 = vrot.lane.b32.xlu0 %v60, 80
    %v177 = vpop.permute.xlu0 %176
    %178 = vrot.lane.b32.xlu0 %v61, 80
    %v179 = vpop.permute.xlu0 %178
    %180 = vrot.lane.b32.xlu0 %v62, 80
    %v181 = vpop.permute.xlu0 %180
    %182 = vrot.lane.b32.xlu0 %v72, 80
    %v183 = vpop.permute.xlu0 %182
    %184 = vrot.lane.b32.xlu0 %v73, 80
    %v185 = vpop.permute.xlu0 %184
    %186 = vrot.lane.b32.xlu0 %v74, 80
    %v187 = vpop.permute.xlu0 %186
    %188 = vrot.lane.b32.xlu0 %v75, 80
    %v189 = vpop.permute.xlu0 %188
    %vm190 = vcmask 654336
    %v191 = vsel %vm190, %v175, %v177
    %v192 = vsel %vm190, %v177, %v179
    %v193 = vsel %vm190, %v179, %v181
    %v194 = vsel %vm190, %v183, %v185
    %v195 = vsel %vm190, %v185, %v187
    %v196 = vsel %vm190, %v187, %v189
    %v205 = vadd.f32 %v160, %v191
    %v206 = vadd.f32 %v161, %v192
    %v207 = vadd.f32 %v162, %v193
    %v208 = vadd.f32 %v163, %v181
    %v209 = vadd.f32 %v164, %v194
    %v210 = vadd.f32 %v165, %v195
    %v211 = vadd.f32 %v166, %v196
    %v212 = vadd.f32 %v167, %v189
    %v213 = vmul.f32 %v205, 0.25
    %v214 = vmul.f32 %v206, 0.25
    %v215 = vmul.f32 %v207, 0.25
    %v216 = vmul.f32 %v208, 0.25
    %v217 = vmul.f32 %v209, 0.25
    %v218 = vmul.f32 %v210, 0.25
    %v219 = vmul.f32 %v211, 0.25
    %v220 = vmul.f32 %v212, 0.25
    %v221 = vadd.f32 %v213, %v214
    %v222 = vadd.f32 %v221, %v215
    %vm223 = vcmask 130048
    %v224 = vsel %vm223, %v216, 0.0
    %v225 = vadd.f32 %v222, %v224
    %226 = vadd.xlane.f32.xlu0 %v225
    %v227 = vpop.xlane.xlu0 %226
    %v228 = vadd.f32 %v217, %v218
    %v229 = vadd.f32 %v228, %v219
    %v230 = vsel %vm223, %v220, 0.0
    %v231 = vadd.f32 %v229, %v230
    %232 = vadd.xlane.f32.xlu0 %v231
    %v233 = vpop.xlane.xlu0 %232
    %v234 = vrcp.pop 400.0
    %v235 = vmul.f32 %v227, %v234
    %v236 = vmul.f32 %v233, %v234
    %v237 = vsub.f32 %v213, %v235
    %v238 = vsub.f32 %v214, %v235
    %v239 = vsub.f32 %v215, %v235
    %v240 = vsub.f32 %v216, %v235
    %v241 = vsub.f32 %v217, %v236
    %v242 = vsub.f32 %v218, %v236
    %v243 = vsub.f32 %v219, %v236
    %v244 = vsub.f32 %v220, %v236
    %v245 = vmul.f32 %v237, %v237
    %v246 = vmul.f32 %v238, %v238
    %v247 = vmul.f32 %v239, %v239
    %v248 = vmul.f32 %v240, %v240
    %v249 = vmul.f32 %v241, %v241
    %v250 = vmul.f32 %v242, %v242
    %v251 = vmul.f32 %v243, %v243
    %v252 = vmul.f32 %v244, %v244
    %v253 = vadd.f32 %v245, %v246
    %v254 = vadd.f32 %v253, %v247
    %v255 = vsel %vm223, %v248, 0.0
    %v256 = vadd.f32 %v254, %v255
    %257 = vadd.xlane.f32.xlu0 %v256
    %v258 = vpop.xlane.xlu0 %257
    %v259 = vadd.f32 %v249, %v250
    %v260 = vadd.f32 %v259, %v251
    %v261 = vsel %vm223, %v252, 0.0
    %v262 = vadd.f32 %v260, %v261
    %263 = vadd.xlane.f32.xlu0 %v262
    %v264 = vpop.xlane.xlu0 %263
    %v265 = vmul.f32 %v258, %v234
    %v266 = vmul.f32 %v264, %v234
    %v267 = vadd.f32 %v265, 1e-05
    %v268 = vadd.f32 %v266, 1e-05
    %v269 = vrsqrt.pop %v267
    %v270 = vrsqrt.pop %v268
    %v271 = vmul.f32 %v237, %v269
    %v272 = vmul.f32 %v238, %v269
    %v273 = vmul.f32 %v239, %v269
    %v274 = vmul.f32 %v240, %v269
    %v275 = vmul.f32 %v241, %v270
    %v276 = vmul.f32 %v242, %v270
    %v277 = vmul.f32 %v243, %v270
    %v278 = vmul.f32 %v244, %v270
    %v279 = vpack.c.bf16 %v275, %v271
    %v280 = vpack.c.bf16 %v276, %v272
    %v281 = vpack.c.bf16 %v277, %v273
    %v282 = vpack.c.bf16 %v278, %v274
    %v283 = vld [vmem:[#allocation5] sm:$0xff]
    %v284 = vld [vmem:[#allocation5 + $0x8] sm:$0xff]
    %v285 = vld [vmem:[#allocation5 + $0x10] sm:$0xff]
    %v286 = vld [vmem:[#allocation5 + $0x18] sm:$0xff]
    %v287 = vld [vmem:[#allocation5 + $0x20] sm:$0xff]
    %v288 = vld [vmem:[#allocation5 + $0x28] sm:$0xff]
    %v289 = vld [vmem:[#allocation5 + $0x30] sm:$0xff]
    %v290 = vld [vmem:[#allocation5 + $0x38] sm:$0xff]
    %v291 = vld [vmem:[#allocation5 + $0x40] sm:$0xff]
    %v292 = vld [vmem:[#allocation5 + $0x48] sm:$0xff]
    %v293 = vld [vmem:[#allocation5 + $0x50] sm:$0xff]
    %v294 = vld [vmem:[#allocation5 + $0x58] sm:$0xff]
    %v295 = vld [vmem:[#allocation5 + $0x60] sm:$0xff]
    %v296 = vld [vmem:[#allocation5 + $0x68] sm:$0xff]
    %v297 = vld [vmem:[#allocation5 + $0x70] sm:$0xff]
    %v298 = vld [vmem:[#allocation5 + $0x78] sm:$0xff]
    %v299 = vld [vmem:[#allocation5 + $0x80] sm:$0xff]
    %v300 = vld [vmem:[#allocation5 + $0x88] sm:$0xff]
    %v301 = vld [vmem:[#allocation5 + $0x90] sm:$0xff]
    %v302 = vld [vmem:[#allocation5 + $0x98] sm:$0xff]
    %v303 = vld [vmem:[#allocation5 + $0xa0] sm:$0xff]
    %v304 = vld [vmem:[#allocation5 + $0xa8] sm:$0xff]
    %v305 = vld [vmem:[#allocation5 + $0xb0] sm:$0xff]
    %v306 = vld [vmem:[#allocation5 + $0xb8] sm:$0xff]
    %v307 = vld [vmem:[#allocation5 + $0xc0] sm:$0xff]
    %v308 = vld [vmem:[#allocation5 + $0xc8] sm:$0xff]
    %v309 = vld [vmem:[#allocation5 + $0xd0] sm:$0xff]
    %v310 = vld [vmem:[#allocation5 + $0xd8] sm:$0xff]
    %v311 = vld [vmem:[#allocation5 + $0xe0] sm:$0xff]
    %v312 = vld [vmem:[#allocation5 + $0xe8] sm:$0xff]
    %v313 = vld [vmem:[#allocation5 + $0xf0] sm:$0xff]
    %v314 = vld [vmem:[#allocation5 + $0xf8] sm:$0xff]
    %v315 = vld [vmem:[#allocation5 + $0x100] sm:$0xff]
    %v316 = vld [vmem:[#allocation5 + $0x108] sm:$0xff]
    %v317 = vld [vmem:[#allocation5 + $0x110] sm:$0xff]
    %v318 = vld [vmem:[#allocation5 + $0x118] sm:$0xff]
    %v319 = vld [vmem:[#allocation5 + $0x120] sm:$0xff]
    %v320 = vld [vmem:[#allocation5 + $0x128] sm:$0xff]
    %v321 = vld [vmem:[#allocation5 + $0x130] sm:$0xff]
    %v322 = vld [vmem:[#allocation5 + $0x138] sm:$0xff]
    %v323 = vld [vmem:[#allocation5 + $0x140] sm:$0xff]
    %v324 = vld [vmem:[#allocation5 + $0x148] sm:$0xff]
    %v325 = vld [vmem:[#allocation5 + $0x150] sm:$0xff]
    %v326 = vld [vmem:[#allocation5 + $0x158] sm:$0xff]
    %v327 = vld [vmem:[#allocation5 + $0x160] sm:$0xff]
    %v328 = vld [vmem:[#allocation5 + $0x168] sm:$0xff]
    %v329 = vld [vmem:[#allocation5 + $0x170] sm:$0xff]
    %v330 = vld [vmem:[#allocation5 + $0x178] sm:$0xff]
    %v331 = vld [vmem:[#allocation5 + $0x180] sm:$0xff]
    %v332 = vld [vmem:[#allocation5 + $0x188] sm:$0xff]
    %v333 = vld [vmem:[%s2] sm:$0x3]
    %v335 = vlaneseq
    %v336 = vshrl.u32 %v335, 7
    %v337 = vsub.s32 0, %v336
    %v338 = vrot.slane %v333, %v337
    %v339 = vlaneseq
    %v340 = vshrl.u32 %v339, 7
    %v341 = vsub.s32 1, %v340
    %v342 = vrot.slane %v333, %v341
    %v395 = vunpack.c.l.b16 %v283
    %v396 = vunpack.c.h.b16 %v283
    %v397 = vunpack.c.l.b16 %v284
    %v398 = vunpack.c.h.b16 %v284
    %v399 = vunpack.c.l.b16 %v285
    %v400 = vunpack.c.h.b16 %v285
    %v401 = vunpack.c.l.b16 %v286
    %v402 = vunpack.c.h.b16 %v286
    %v403 = vunpack.c.l.b16 %v287
    %v404 = vunpack.c.h.b16 %v287
    %v405 = vunpack.c.l.b16 %v288
    %v406 = vunpack.c.h.b16 %v288
    %v407 = vunpack.c.l.b16 %v289
    %v408 = vunpack.c.h.b16 %v289
    %v409 = vunpack.c.l.b16 %v290
    %v410 = vunpack.c.h.b16 %v290
    %v411 = vunpack.c.l.b16 %v291
    %v412 = vunpack.c.h.b16 %v291
    %v413 = vunpack.c.l.b16 %v292
    %v414 = vunpack.c.h.b16 %v292
    %v415 = vunpack.c.l.b16 %v293
    %v416 = vunpack.c.h.b16 %v293
    %v417 = vunpack.c.l.b16 %v294
    %v418 = vunpack.c.h.b16 %v294
    %v419 = vunpack.c.l.b16 %v295
    %v420 = vunpack.c.h.b16 %v295
    %v421 = vunpack.c.l.b16 %v296
    %v422 = vunpack.c.h.b16 %v296
    %v423 = vunpack.c.l.b16 %v297
    %v424 = vunpack.c.h.b16 %v297
    %v425 = vunpack.c.l.b16 %v298
    %v426 = vunpack.c.h.b16 %v298
    %v427 = vunpack.c.l.b16 %v299
    %v428 = vunpack.c.h.b16 %v299
    %v429 = vunpack.c.l.b16 %v300
    %v430 = vunpack.c.h.b16 %v300
    %v431 = vunpack.c.l.b16 %v301
    %v432 = vunpack.c.h.b16 %v301
    %v433 = vunpack.c.l.b16 %v302
    %v434 = vunpack.c.h.b16 %v302
    %v435 = vunpack.c.l.b16 %v303
    %v436 = vunpack.c.h.b16 %v303
    %v437 = vunpack.c.l.b16 %v304
    %v438 = vunpack.c.h.b16 %v304
    %v439 = vunpack.c.l.b16 %v305
    %v440 = vunpack.c.h.b16 %v305
    %v441 = vunpack.c.l.b16 %v306
    %v442 = vunpack.c.h.b16 %v306
    %v443 = vunpack.c.l.b16 %v307
    %v444 = vunpack.c.h.b16 %v307
    %v445 = vunpack.c.l.b16 %v308
    %v446 = vunpack.c.h.b16 %v308
    %v447 = vunpack.c.l.b16 %v309
    %v448 = vunpack.c.h.b16 %v309
    %v449 = vunpack.c.l.b16 %v310
    %v450 = vunpack.c.h.b16 %v310
    %v451 = vunpack.c.l.b16 %v311
    %v452 = vunpack.c.h.b16 %v311
    %v453 = vunpack.c.l.b16 %v312
    %v454 = vunpack.c.h.b16 %v312
    %v455 = vunpack.c.l.b16 %v313
    %v456 = vunpack.c.h.b16 %v313
    %v457 = vunpack.c.l.b16 %v314
    %v458 = vunpack.c.h.b16 %v314
    %v459 = vunpack.c.l.b16 %v315
    %v460 = vunpack.c.h.b16 %v315
    %v461 = vunpack.c.l.b16 %v316
    %v462 = vunpack.c.h.b16 %v316
    %v463 = vunpack.c.l.b16 %v317
    %v464 = vunpack.c.h.b16 %v317
    %v465 = vunpack.c.l.b16 %v318
    %v466 = vunpack.c.h.b16 %v318
    %v467 = vunpack.c.l.b16 %v319
    %v468 = vunpack.c.h.b16 %v319
    %v469 = vunpack.c.l.b16 %v320
    %v470 = vunpack.c.h.b16 %v320
    %v471 = vunpack.c.l.b16 %v321
    %v472 = vunpack.c.h.b16 %v321
    %v473 = vunpack.c.l.b16 %v322
    %v474 = vunpack.c.h.b16 %v322
    %v475 = vunpack.c.l.b16 %v323
    %v476 = vunpack.c.h.b16 %v323
    %v477 = vunpack.c.l.b16 %v324
    %v478 = vunpack.c.h.b16 %v324
    %v479 = vunpack.c.l.b16 %v325
    %v480 = vunpack.c.h.b16 %v325
    %v481 = vunpack.c.l.b16 %v326
    %v482 = vunpack.c.h.b16 %v326
    %v483 = vunpack.c.l.b16 %v327
    %v484 = vunpack.c.h.b16 %v327
    %v485 = vunpack.c.l.b16 %v328
    %v486 = vunpack.c.h.b16 %v328
    %v487 = vunpack.c.l.b16 %v329
    %v488 = vunpack.c.h.b16 %v329
    %v489 = vunpack.c.l.b16 %v330
    %v490 = vunpack.c.h.b16 %v330
    %v491 = vunpack.c.l.b16 %v331
    %v492 = vunpack.c.h.b16 %v331
    %v493 = vunpack.c.l.b16 %v332
    %v494 = vunpack.c.h.b16 %v332
    %v495 = vpack.c.b16 %v397, %v395
    %v496 = vpack.c.b16 %v398, %v396
    %v497 = vpack.c.b16 %v401, %v399
    %v498 = vpack.c.b16 %v402, %v400
    %v499 = vpack.c.b16 %v405, %v403
    %v500 = vpack.c.b16 %v406, %v404
    %v501 = vpack.c.b16 %v409, %v407
    %v502 = vpack.c.b16 %v410, %v408
    %v503 = vpack.c.b16 %v413, %v411
    %v504 = vpack.c.b16 %v414, %v412
    %v505 = vpack.c.b16 %v417, %v415
    %v506 = vpack.c.b16 %v418, %v416
    %v507 = vpack.c.b16 %v421, %v419
    %v508 = vpack.c.b16 %v422, %v420
    %v509 = vpack.c.b16 %v425, %v423
    %v510 = vpack.c.b16 %v426, %v424
    %v511 = vpack.c.b16 %v429, %v427
    %v512 = vpack.c.b16 %v430, %v428
    %v513 = vpack.c.b16 %v433, %v431
    %v514 = vpack.c.b16 %v434, %v432
    %v515 = vpack.c.b16 %v437, %v435
    %v516 = vpack.c.b16 %v438, %v436
    %v517 = vpack.c.b16 %v441, %v439
    %v518 = vpack.c.b16 %v442, %v440
    %v519 = vpack.c.b16 %v445, %v443
    %v520 = vpack.c.b16 %v446, %v444
    %v521 = vpack.c.b16 %v449, %v447
    %v522 = vpack.c.b16 %v450, %v448
    %v523 = vpack.c.b16 %v453, %v451
    %v524 = vpack.c.b16 %v454, %v452
    %v525 = vpack.c.b16 %v457, %v455
    %v526 = vpack.c.b16 %v458, %v456
    %v527 = vpack.c.b16 %v461, %v459
    %v528 = vpack.c.b16 %v462, %v460
    %v529 = vpack.c.b16 %v465, %v463
    %v530 = vpack.c.b16 %v466, %v464
    %v531 = vpack.c.b16 %v469, %v467
    %v532 = vpack.c.b16 %v470, %v468
    %v533 = vpack.c.b16 %v473, %v471
    %v534 = vpack.c.b16 %v474, %v472
    %v535 = vpack.c.b16 %v477, %v475
    %v536 = vpack.c.b16 %v478, %v476
    %v537 = vpack.c.b16 %v481, %v479
    %v538 = vpack.c.b16 %v482, %v480
    %v539 = vpack.c.b16 %v485, %v483
    %v540 = vpack.c.b16 %v486, %v484
    %v541 = vpack.c.b16 %v489, %v487
    %v542 = vpack.c.b16 %v490, %v488
    %v543 = vpack.c.b16 %v493, %v491
    %v544 = vpack.c.b16 %v494, %v492
    %v596 = vsel %vm223, %v282, 0
    %598 = vmatprep.subr.bf16.mxu0 %v496
    %599 = vmatpush1.bf16.msra.mxu0 %v495
    %600 = vmatprep.subr.bf16.mxu0 %v498
    %601 = vmatpush1.bf16.msra.mxu0 %v497
    %602 = vmatprep.subr.bf16.mxu0 %v500
    %603 = vmatpush1.bf16.msra.mxu0 %v499
    %604 = vmatprep.subr.bf16.mxu0 %v502
    %605 = vmatpush1.bf16.msra.mxu0 %v501
    %606 = vmatprep.subr.bf16.mxu0 %v504
    %607 = vmatpush1.bf16.msra.mxu0 %v503
    %608 = vmatprep.subr.bf16.mxu0 %v506
    %609 = vmatpush1.bf16.msra.mxu0 %v505
    %610 = vmatprep.subr.bf16.mxu0 %v508
    %611 = vmatpush1.bf16.msra.mxu0 %v507
    %612 = vmatprep.subr.bf16.mxu0 %v510
    %613 = vmatpush1.bf16.msra.mxu0 %v509
    %614 = vmatprep.subr.bf16.mxu0 %v512
    %615 = vmatpush1.bf16.msra.mxu0 %v511
    %616 = vmatprep.subr.bf16.mxu0 %v514
    %617 = vmatpush1.bf16.msra.mxu0 %v513
    %618 = vmatprep.subr.bf16.mxu0 %v516
    %619 = vmatpush1.bf16.msra.mxu0 %v515
    %620 = vmatprep.subr.bf16.mxu0 %v518
    %621 = vmatpush1.bf16.msra.mxu0 %v517
    %622 = vmatprep.subr.bf16.mxu0 %v520
    %623 = vmatpush1.bf16.msra.mxu0 %v519
    %624 = vmatprep.subr.bf16.mxu0 %v522
    %625 = vmatpush1.bf16.msra.mxu0 %v521
    %626 = vmatprep.subr.bf16.mxu0 %v524
    %627 = vmatpush1.bf16.msra.mxu0 %v523
    %628 = vmatprep.subr.bf16.mxu0 %v526
    %629 = vmatpush1.bf16.msra.mxu0 %v525
    %630 = vmatprep.mubr.bf16.mxu0 %v280
    %631 = vmatmul.mubr.bf16.gmra.mrb[0].mxu0 %v279
    %v632 = vpop.f32.mrb[0].mxu0
    %v633 = vadd.f32 %v338, %v632
    %v634 = vpop.f32.mrb[0].mxu0
    %v635 = vadd.f32 %v342, %v634
    %v636 = vpop.f32.mrb[0].mxu0
    %v637 = vadd.f32 %v338, %v636
    %v638 = vpop.f32.mrb[0].mxu0
    %v639 = vadd.f32 %v342, %v638
    %640 = vdwg.mxu0
    %641 = vmatprep.subr.bf16.mxu0 %v528
    %642 = vmatpush1.bf16.msra.mxu0 %v527
    %643 = vmatprep.subr.bf16.mxu0 %v530
    %644 = vmatpush1.bf16.msra.mxu0 %v529
    %645 = vmatprep.subr.bf16.mxu0 %v532
    %646 = vmatpush1.bf16.msra.mxu0 %v531
    %647 = vmatprep.subr.bf16.mxu0 %v534
    %648 = vmatpush1.bf16.msra.mxu0 %v533
    %649 = vmatprep.subr.bf16.mxu0 %v536
    %650 = vmatpush1.bf16.msra.mxu0 %v535
    %651 = vmatprep.subr.bf16.mxu0 %v538
    %652 = vmatpush1.bf16.msra.mxu0 %v537
    %653 = vmatprep.subr.bf16.mxu0 %v540
    %654 = vmatpush1.bf16.msra.mxu0 %v539
    %655 = vmatprep.subr.bf16.mxu0 %v542
    %656 = vmatpush1.bf16.msra.mxu0 %v541
    %657 = vmatprep.subr.bf16.mxu0 %v544
    %658 = vmatpush1.bf16.msra.mxu0 %v543
    %659 = vmatprep.subr.bf16.mxu0 0
    %660 = vmatpush1.bf16.msra.mxu0 0
    %661 = vmatprep.subr.bf16.mxu0 0
    %662 = vmatpush1.bf16.msra.mxu0 0
    %663 = vmatprep.subr.bf16.mxu0 0
    %664 = vmatpush1.bf16.msra.mxu0 0
    %665 = vmatprep.subr.bf16.mxu0 0
    %666 = vmatpush1.bf16.msra.mxu0 0
    %667 = vmatprep.subr.bf16.mxu0 0
    %668 = vmatpush1.bf16.msra.mxu0 0
    %669 = vmatprep.subr.bf16.mxu0 0
    %670 = vmatpush1.bf16.msra.mxu0 0
    %671 = vmatprep.subr.bf16.mxu0 0
    %672 = vmatpush1.bf16.msra.mxu0 0
    %673 = vmatprep.mubr.bf16.mxu0 %v596
    %674 = vmatmul.mubr.bf16.gmra.mrb[0].mxu0 %v281
    %v675 = vpop.f32.mrb[0].mxu0
    %v676 = vadd.f32 %v633, %v675
    %v677 = vpop.f32.mrb[0].mxu0
    %v678 = vadd.f32 %v635, %v677
    %v679 = vpop.f32.mrb[0].mxu0
    %v680 = vadd.f32 %v637, %v679
    %v681 = vpop.f32.mrb[0].mxu0
    %v682 = vadd.f32 %v639, %v681
    %683 = vdwg.mxu0
    %v684 = vxor.u32 %v676, 2147483648
    %v685 = vxor.u32 %v678, 2147483648
    %v686 = vxor.u32 %v680, 2147483648
    %v687 = vxor.u32 %v682, 2147483648
    %v688 = vmul.f32 %v684, 1.442695
    %v689 = vpow.pop %v688
    %v690 = vmul.f32 %v685, 1.442695
    %v691 = vpow.pop %v690
    %v692 = vmul.f32 %v686, 1.442695
    %v693 = vpow.pop %v692
    %v694 = vmul.f32 %v687, 1.442695
    %v695 = vpow.pop %v694
    %v696 = vadd.f32 %v689, 1.0
    %v697 = vadd.f32 %v691, 1.0
    %v698 = vadd.f32 %v693, 1.0
    %v699 = vadd.f32 %v695, 1.0
    %v700 = vrcp.pop %v696
    %v701 = vmul.f32 1.0, %v700
    %v702 = vrcp.pop %v697
    %v703 = vmul.f32 1.0, %v702
    %v704 = vrcp.pop %v698
    %v705 = vmul.f32 1.0, %v704
    %v706 = vrcp.pop %v699
    %v707 = vmul.f32 1.0, %v706
    %v708 = vpack.c.bf16 %v705, %v701
    %v709 = vpack.c.bf16 %v707, %v703
    %v710 = vld [vmem:[%s3] sm:$0xf]
    %v711 = vld [vmem:[%s3 + $0x4] sm:$0xf]
    %v712 = vld [vmem:[%s3 + $0x8] sm:$0xf]
    %v713 = vld [vmem:[%s3 + $0xc] sm:$0xf]
    %v714 = vld [vmem:[%s3 + $0x10] sm:$0xf]
    %v715 = vld [vmem:[%s3 + $0x14] sm:$0xf]
    %v716 = vld [vmem:[%s3 + $0x18] sm:$0xf]
    %v717 = vld [vmem:[%s3 + $0x1c] sm:$0xf]
    %v718 = vld [vmem:[%s3 + $0x20] sm:$0xf]
    %v719 = vld [vmem:[%s3 + $0x24] sm:$0xf]
    %v720 = vld [vmem:[%s3 + $0x28] sm:$0xf]
    %v721 = vld [vmem:[%s3 + $0x2c] sm:$0xf]
    %v722 = vld [vmem:[%s3 + $0x30] sm:$0xf]
    %v723 = vld [vmem:[%s3 + $0x34] sm:$0xf]
    %v724 = vld [vmem:[%s3 + $0x38] sm:$0xf]
    %v725 = vld [vmem:[%s3 + $0x3c] sm:$0xf]
    %v726 = vld [vmem:[%s3 + $0x40] sm:$0xf]
    %v727 = vld [vmem:[%s3 + $0x44] sm:$0xf]
    %v728 = vld [vmem:[%s3 + $0x48] sm:$0xf]
    %v729 = vld [vmem:[%s3 + $0x4c] sm:$0xf]
    %v730 = vld [vmem:[%s3 + $0x50] sm:$0xf]
    %v731 = vld [vmem:[%s3 + $0x54] sm:$0xf]
    %v732 = vld [vmem:[%s3 + $0x58] sm:$0xf]
    %v733 = vld [vmem:[%s3 + $0x5c] sm:$0xf]
    %v734 = vld [vmem:[%s3 + $0x60] sm:$0xf]
    %v735 = vld [vmem:[%s4] sm:$0x1]
    %v737 = vlaneseq
    %v738 = vshrl.u32 %v737, 7
    %v739 = vsub.s32 0, %v738
    %v740 = vrot.slane %v735, %v739
    %v767 = vunpack.c.l.b16 %v710
    %v768 = vunpack.c.l.b16 %v711
    %v769 = vunpack.c.l.b16 %v712
    %v770 = vunpack.c.l.b16 %v713
    %v771 = vunpack.c.l.b16 %v714
    %v772 = vunpack.c.l.b16 %v715
    %v773 = vunpack.c.l.b16 %v716
    %v774 = vunpack.c.l.b16 %v717
    %v775 = vunpack.c.l.b16 %v718
    %v776 = vunpack.c.l.b16 %v719
    %v777 = vunpack.c.l.b16 %v720
    %v778 = vunpack.c.l.b16 %v721
    %v779 = vunpack.c.l.b16 %v722
    %v780 = vunpack.c.l.b16 %v723
    %v781 = vunpack.c.l.b16 %v724
    %v782 = vunpack.c.l.b16 %v725
    %v783 = vunpack.c.l.b16 %v726
    %v784 = vunpack.c.l.b16 %v727
    %v785 = vunpack.c.l.b16 %v728
    %v786 = vunpack.c.l.b16 %v729
    %v787 = vunpack.c.l.b16 %v730
    %v788 = vunpack.c.l.b16 %v731
    %v789 = vunpack.c.l.b16 %v732
    %v790 = vunpack.c.l.b16 %v733
    %v791 = vunpack.c.l.b16 %v734
    %v792 = vpack.c.b16 %v768, %v767
    %v793 = vpack.c.b16 %v770, %v769
    %v794 = vpack.c.b16 %v772, %v771
    %v795 = vpack.c.b16 %v774, %v773
    %v796 = vpack.c.b16 %v776, %v775
    %v797 = vpack.c.b16 %v778, %v777
    %v798 = vpack.c.b16 %v780, %v779
    %v799 = vpack.c.b16 %v782, %v781
    %v800 = vpack.c.b16 %v784, %v783
    %v801 = vpack.c.b16 %v786, %v785
    %v802 = vpack.c.b16 %v788, %v787
    %v803 = vpack.c.b16 %v790, %v789
    %v804 = vpack.c.b16 %v791, %v791
    %vm817 = vcmask 588800
    %v819 = vsel %vm817, %v709, 0
    %vm821 = vcmask 1043456
    %v823 = vsel %vm821, %v804, 0
    %825 = vmatprep.subr.bf16.mxu0 0
    %826 = vmatpush1.bf16.msra.mxu0 %v792
    %827 = vmatprep.subr.bf16.mxu0 0
    %828 = vmatpush1.bf16.msra.mxu0 %v793
    %829 = vmatprep.subr.bf16.mxu0 0
    %830 = vmatpush1.bf16.msra.mxu0 %v794
    %831 = vmatprep.subr.bf16.mxu0 0
    %832 = vmatpush1.bf16.msra.mxu0 %v795
    %833 = vmatprep.subr.bf16.mxu0 0
    %834 = vmatpush1.bf16.msra.mxu0 %v796
    %835 = vmatprep.subr.bf16.mxu0 0
    %836 = vmatpush1.bf16.msra.mxu0 %v797
    %837 = vmatprep.subr.bf16.mxu0 0
    %838 = vmatpush1.bf16.msra.mxu0 %v798
    %839 = vmatprep.subr.bf16.mxu0 0
    %840 = vmatpush1.bf16.msra.mxu0 %v799
    %841 = vmatprep.subr.bf16.mxu0 0
    %842 = vmatpush1.bf16.msra.mxu0 %v800
    %843 = vmatprep.subr.bf16.mxu0 0
    %844 = vmatpush1.bf16.msra.mxu0 %v801
    %845 = vmatprep.subr.bf16.mxu0 0
    %846 = vmatpush1.bf16.msra.mxu0 %v802
    %847 = vmatprep.subr.bf16.mxu0 0
    %848 = vmatpush1.bf16.msra.mxu0 %v803
    %849 = vmatprep.subr.bf16.mxu0 0
    %850 = vmatpush1.bf16.msra.mxu0 %v823
    %851 = vmatprep.subr.bf16.mxu0 0
    %852 = vmatpush1.bf16.msra.mxu0 0
    %853 = vmatprep.subr.bf16.mxu0 0
    %854 = vmatpush1.bf16.msra.mxu0 0
    %855 = vmatprep.subr.bf16.mxu0 0
    %856 = vmatpush1.bf16.msra.mxu0 0
    %857 = vmatprep.mubr.bf16.mxu0 %v819
    %858 = vmatmul.mubr.bf16.gmra.mrb[0].mxu0 %v708
    %v859 = vpop.f32.mrb[0].mxu0
    %v860 = vadd.f32 %v740, %v859
    %v861 = vpop.f32.mrb[0].mxu0
    %v862 = vpop.f32.mrb[0].mxu0
    %v863 = vadd.f32 %v740, %v862
    %v864 = vpop.f32.mrb[0].mxu0
    %865 = vdwg.mxu0
    %866 = vst.msk [vmem:[#allocation7] sm:$0xff] %vm223, %v860
    %867 = vst.msk [vmem:[#allocation7 + $0x8] sm:$0xff] %vm223, %v863
    // Predicated region
    $region30: #{tpu_custom_call.1} parent=1 // pred_check
      _
    $region31: #{tpu_custom_call.1} parent=1 // pred_check_branch
      %869 = sbr.rel (0) target = $region33
    $region32: #{tpu_custom_call.1} parent=1 // pred_region
      %s871 = ssub.s32 256, 256
      %872 = vsyncadd [#allocation4], %s871
      %s873 = sshll.u32 [#allocation7], 4
      %s874 = int_to_ptr.vmem [resolvable:$true] %s873
      %879 = dma.vmem_to_hbm [thread:$0]  %s874, 256, %s5, [#allocation4], 128, 128, 8
    $region33: #{tpu_custom_call.1} parent=1 // pred_fallthru
      _
    // Predicated region
    $region34: #{tpu_custom_call.1} parent=1 // pred_check
      _
    $region35: #{tpu_custom_call.1} parent=1 // pred_check_branch
      %881 = sbr.rel (0) target = $region37
    $region36: #{tpu_custom_call.1} parent=1 // pred_region
      %882 = dma.done [#allocation4], 256
    $region37: #{tpu_custom_call.1} parent=1 // pred_fallthru
      _
    %883 = vsyncpa [#allocation3], 1
    %884 = vsyncpa [#allocation6], 1
    %885 = vsyncpa [#allocation4], 1

</llo_original>
